<compile_context>
chip_gen: v5e
topology: v5e:2x2
jax: 0.10.0
libtpu: 0.0.40
codegen_flags: <defaults>
</compile_context>

<pallas_src>
import jax
import jax.numpy as jnp
from jax.experimental import pallas as pl
from jax.experimental.pallas import tpu as pltpu

TASK_EMB_DIM = 8
HID1 = 50
HID2 = 100
TARGET_PARAM_SHAPE = [(2, 2), (3, 3)]
OUT_DIMS = [4, 9]            # prod of each target shape
OUT_TOTAL = sum(OUT_DIMS)    # 13 (fused heads)


def _mlp_kernel(x_ref, w1_ref, w2_ref, b2_ref, w3_ref, b3_ref, out_ref):
    cd = w1_ref.dtype            # MXU operand dtype (bf16)
    ew = b2_ref.dtype            # elementwise dtype (bf16 on v6e/v7x, f32 on v5e)

    x = x_ref[...]                                                      # (9, TB)

    # fc1 (+ bias via the folded ones row) + ReLU.  f32 MXU accumulation.
    h1 = jnp.dot(w1_ref[...], x, preferred_element_type=jnp.float32)    # (50, TB)
    h1 = jnp.maximum(h1.astype(ew), 0.0).astype(cd)                     # bf16 live

    # fc2 + bias + ReLU.
    h2 = jnp.dot(w2_ref[...], h1, preferred_element_type=jnp.float32)   # (100, TB)
    h2 = jnp.maximum(h2.astype(ew) + b2_ref[...], 0.0).astype(cd)       # bf16 live

    # Fused output heads: Linear(100,4) ++ Linear(100,9) as one (13,100) dot.
    out = jnp.dot(w3_ref[...], h2, preferred_element_type=jnp.float32)  # (13, TB)
    out_ref[...] = (out.astype(ew) + b3_ref[...]).astype(out_ref.dtype)


def _round_up(n, m):
    return -(-n // m) * m


def _default_elementwise_dtype():
    """bf16 elementwise on v6e/v7x (bf16 VPU); f32 on v5e and older."""
    try:
        kind = jax.devices()[0].device_kind.lower()
    except Exception:
        return jnp.float32
    for old in ("v2", "v3", "v4", "v5"):
        if old in kind:
            return jnp.float32
    return jnp.bfloat16


def mlp_forward(x, params, *, compute_dtype=jnp.bfloat16, elementwise_dtype=None,
                max_tb=8192, min_grid_steps=4):
    """x: (B, TASK_EMB_DIM) float32.  params: dict of weights/biases.

    Returns [ (B, 2, 2), (B, 3, 3) ] float32, matching the PyTorch module.
    """
    if elementwise_dtype is None:
        elementwise_dtype = _default_elementwise_dtype()

    B = x.shape[0]

    # ---- batch tiling ------------------------------------------------------
    # Lane-dense (multiple of 128), large enough to amortize the ~0.35 us
    # per-grid-step overhead, but small enough that the grid keeps at least
    # `min_grid_steps` steps (v7x megacore sharding + prefetch pipeline).
    b128 = _round_up(B, 128)
    tb = min(max_tb, b128, max(128, _round_up(b128 // min_grid_steps, 128)))
    b_pad = _round_up(b128, tb)
    grid = (b_pad // tb,)

    # ---- layout plumbing (feature-major, fc1-bias fold, head fusion) --------
    ones_row = jnp.ones((1, B), x.dtype)
    x_aug = jnp.concatenate([x.T, ones_row], axis=0)                     # (9, B)
    x_aug = jnp.pad(x_aug, ((0, 0), (0, b_pad - B))).astype(compute_dtype)

    w1_aug = jnp.concatenate([params["w1"].T, params["b1"].T],
                             axis=1).astype(compute_dtype)               # (50, 9)
    w2_t = params["w2"].T.astype(compute_dtype)                          # (100, 50)
    w3_t = jnp.concatenate([params["w3a"], params["w3b"]],
                           axis=1).T.astype(compute_dtype)               # (13, 100)
    b2_t = params["b2"].T.astype(elementwise_dtype)                      # (100, 1)
    b3_t = jnp.concatenate([params["b3a"], params["b3b"]],
                           axis=1).T.astype(elementwise_dtype)           # (13, 1)

    # Weights/biases: full-array blocks with constant index maps -> resident
    # in VMEM across all grid steps (no re-DMA).  Only x streams in, only the
    # fused output streams out.
    def resident(shape):
        return pl.BlockSpec(shape, lambda i: (0,) * len(shape))

    out_t = pl.pallas_call(
        _mlp_kernel,
        out_shape=jax.ShapeDtypeStruct((OUT_TOTAL, b_pad), jnp.float32),
        grid=grid,
        in_specs=[
            pl.BlockSpec((TASK_EMB_DIM + 1, tb), lambda i: (0, i)),  # x (streamed)
            resident(w1_aug.shape),
            resident(w2_t.shape), resident(b2_t.shape),
            resident(w3_t.shape), resident(b3_t.shape),
        ],
        out_specs=pl.BlockSpec((OUT_TOTAL, tb), lambda i: (0, i)),
        compiler_params=pltpu.CompilerParams(
            dimension_semantics=("parallel",),
            vmem_limit_bytes=48 * 1024 * 1024,
        ),
    )(x_aug, w1_aug, w2_t, b2_t, w3_t, b3_t)

    # Glue: drop batch padding, back to batch-major, split fused heads.
    out = out_t[:, :B].T                                   # (B, 13) float32
    out_a = out[:, :OUT_DIMS[0]].reshape(-1, *TARGET_PARAM_SHAPE[0])
    out_b = out[:, OUT_DIMS[0]:].reshape(-1, *TARGET_PARAM_SHAPE[1])
    return [out_a, out_b]


def init_params(key):
    ks = jax.random.split(key, 8)
    scale = 0.1
    # Stored as (in_features, out_features); biases as (1, N).
    return {
        "w1": scale * jax.random.normal(ks[0], (TASK_EMB_DIM, HID1), jnp.float32),
        "b1": scale * jax.random.normal(ks[1], (1, HID1), jnp.float32),
        "w2": scale * jax.random.normal(ks[2], (HID1, HID2), jnp.float32),
        "b2": scale * jax.random.normal(ks[3], (1, HID2), jnp.float32),
        "w3a": scale * jax.random.normal(ks[4], (HID2, OUT_DIMS[0]), jnp.float32),
        "b3a": scale * jax.random.normal(ks[5], (1, OUT_DIMS[0]), jnp.float32),
        "w3b": scale * jax.random.normal(ks[6], (HID2, OUT_DIMS[1]), jnp.float32),
        "b3b": scale * jax.random.normal(ks[7], (1, OUT_DIMS[1]), jnp.float32),
    }


if __name__ == "__main__":
    key = jax.random.PRNGKey(0)
    pkey, xkey = jax.random.split(key)
    params = init_params(pkey)

    B = 2
    x = jax.random.normal(xkey, (B, TASK_EMB_DIM), jnp.float32)

    outs = mlp_forward(x, params)
    outs = jax.block_until_ready(outs)

    # Reference check in plain JAX (f32).
    h1 = jnp.maximum(x @ params["w1"] + params["b1"], 0.0)
    h2 = jnp.maximum(h1 @ params["w2"] + params["b2"], 0.0)
    ref_a = (h2 @ params["w3a"] + params["b3a"]).reshape(-1, 2, 2)
    ref_b = (h2 @ params["w3b"] + params["b3b"]).reshape(-1, 3, 3)

    assert outs[0].shape == (B, 2, 2) and outs[1].shape == (B, 3, 3)
    # bf16 MXU operands (and bf16 bias/ReLU on v6e/v7x) -> loosened tolerance
    # vs the f32 reference.
    assert jnp.allclose(outs[0], ref_a, atol=1e-2, rtol=1e-2)
    assert jnp.allclose(outs[1], ref_b, atol=1e-2, rtol=1e-2)

    print("KERNEL_OK")
</pallas_src>

<mosaic_0001>
module attributes {stable_mosaic.version = 11 : i64} {
  func.func @_mlp_kernel(%arg0: i32, %arg1: memref<9x128xbf16, #tpu.memory_space<vmem>>, %arg2: memref<50x9xbf16, #tpu.memory_space<vmem>>, %arg3: memref<100x50xbf16, #tpu.memory_space<vmem>>, %arg4: memref<100x1xbf16, #tpu.memory_space<vmem>>, %arg5: memref<13x100xbf16, #tpu.memory_space<vmem>>, %arg6: memref<13x1xbf16, #tpu.memory_space<vmem>>, %arg7: memref<13x128xf32, #tpu.memory_space<vmem>>) attributes {dimension_semantics = [#tpu.dimension_semantics<parallel>], iteration_bounds = array<i64: 1>, scalar_prefetch = 0 : i64, scratch_operands = 0 : i64, tpu.core_type = #tpu.core_type<tc>, window_params = [{transform_indices = @transform_0, window_bounds = array<i64: 9, 128>}, {pipeline_mode = #tpu.pipeline_mode<synchronous>, transform_indices = @transform_1, window_bounds = array<i64: 50, 9>}, {pipeline_mode = #tpu.pipeline_mode<synchronous>, transform_indices = @transform_2, window_bounds = array<i64: 100, 50>}, {pipeline_mode = #tpu.pipeline_mode<synchronous>, transform_indices = @transform_3, window_bounds = array<i64: 100, 1>}, {pipeline_mode = #tpu.pipeline_mode<synchronous>, transform_indices = @transform_4, window_bounds = array<i64: 13, 100>}, {pipeline_mode = #tpu.pipeline_mode<synchronous>, transform_indices = @transform_5, window_bounds = array<i64: 13, 1>}, {transform_indices = @transform_6, window_bounds = array<i64: 13, 128>}]} {
    %c0 = arith.constant 0 : index
    %c0_0 = arith.constant 0 : index
    %0 = vector.load %arg1[%c0, %c0_0] : memref<9x128xbf16, #tpu.memory_space<vmem>>, vector<9x128xbf16>
    %c0_1 = arith.constant 0 : index
    %c0_2 = arith.constant 0 : index
    %1 = vector.load %arg2[%c0_1, %c0_2] : memref<50x9xbf16, #tpu.memory_space<vmem>>, vector<50x9xbf16>
    %cst = arith.constant dense<0.000000e+00> : vector<50x128xf32>
    %2 = tpu.matmul %1, %0, %cst {dimension_numbers = #tpu.dot_dimension_numbers<[1], [0], [0], [1], [0, 0, 1, 1], [], []>} : vector<50x9xbf16>, vector<9x128xbf16>, vector<50x128xf32> -> vector<50x128xf32>
    %3 = arith.truncf %2 : vector<50x128xf32> to vector<50x128xbf16>
    %cst_3 = arith.constant 0.000000e+00 : bf16
    %4 = vector.broadcast %cst_3 : bf16 to vector<50x128xbf16>
    %5 = arith.maximumf %3, %4 : vector<50x128xbf16>
    %c0_4 = arith.constant 0 : index
    %c0_5 = arith.constant 0 : index
    %6 = vector.load %arg3[%c0_4, %c0_5] : memref<100x50xbf16, #tpu.memory_space<vmem>>, vector<100x50xbf16>
    %cst_6 = arith.constant dense<0.000000e+00> : vector<100x128xf32>
    %7 = tpu.matmul %6, %5, %cst_6 {dimension_numbers = #tpu.dot_dimension_numbers<[1], [0], [0], [1], [0, 0, 1, 1], [], []>} : vector<100x50xbf16>, vector<50x128xbf16>, vector<100x128xf32> -> vector<100x128xf32>
    %8 = arith.truncf %7 : vector<100x128xf32> to vector<100x128xbf16>
    %c0_7 = arith.constant 0 : index
    %c0_8 = arith.constant 0 : index
    %9 = vector.load %arg4[%c0_7, %c0_8] : memref<100x1xbf16, #tpu.memory_space<vmem>>, vector<100x1xbf16>
    %10 = vector.broadcast %9 : vector<100x1xbf16> to vector<100x128xbf16>
    %11 = arith.addf %8, %10 : vector<100x128xbf16>
    %cst_9 = arith.constant 0.000000e+00 : bf16
    %12 = vector.broadcast %cst_9 : bf16 to vector<100x128xbf16>
    %13 = arith.maximumf %11, %12 : vector<100x128xbf16>
    %c0_10 = arith.constant 0 : index
    %c0_11 = arith.constant 0 : index
    %14 = vector.load %arg5[%c0_10, %c0_11] : memref<13x100xbf16, #tpu.memory_space<vmem>>, vector<13x100xbf16>
    %cst_12 = arith.constant dense<0.000000e+00> : vector<13x128xf32>
    %15 = tpu.matmul %14, %13, %cst_12 {dimension_numbers = #tpu.dot_dimension_numbers<[1], [0], [0], [1], [0, 0, 1, 1], [], []>} : vector<13x100xbf16>, vector<100x128xbf16>, vector<13x128xf32> -> vector<13x128xf32>
    %16 = arith.truncf %15 : vector<13x128xf32> to vector<13x128xbf16>
    %c0_13 = arith.constant 0 : index
    %c0_14 = arith.constant 0 : index
    %17 = vector.load %arg6[%c0_13, %c0_14] : memref<13x1xbf16, #tpu.memory_space<vmem>>, vector<13x1xbf16>
    %18 = vector.broadcast %17 : vector<13x1xbf16> to vector<13x128xbf16>
    %19 = arith.addf %16, %18 : vector<13x128xbf16>
    %20 = arith.extf %19 : vector<13x128xbf16> to vector<13x128xf32>
    %c0_15 = arith.constant 0 : index
    %c0_16 = arith.constant 0 : index
    %21 = vector.load %arg7[%c0_15, %c0_16] : memref<13x128xf32, #tpu.memory_space<vmem>>, vector<13x128xf32>
    tpu.vector_store %arg7[%c0_15, %c0_16], %20 {strides = array<i32>} : memref<13x128xf32, #tpu.memory_space<vmem>>, vector<13x128xf32>,
    return
  }
  func.func @transform_0(%arg0: i32) -> (i32, i32) {
    %c0_i32 = arith.constant 0 : i32
    %c0_i32_0 = arith.constant 0 : i32
    return %c0_i32, %arg0 : i32, i32
  }
  func.func @transform_1(%arg0: i32) -> (i32, i32) {
    %c0_i32 = arith.constant 0 : i32
    %c0_i32_0 = arith.constant 0 : i32
    %c0_i32_1 = arith.constant 0 : i32
    return %c0_i32, %c0_i32_0 : i32, i32
  }
  func.func @transform_2(%arg0: i32) -> (i32, i32) {
    %c0_i32 = arith.constant 0 : i32
    %c0_i32_0 = arith.constant 0 : i32
    %c0_i32_1 = arith.constant 0 : i32
    return %c0_i32, %c0_i32_0 : i32, i32
  }
  func.func @transform_3(%arg0: i32) -> (i32, i32) {
    %c0_i32 = arith.constant 0 : i32
    %c0_i32_0 = arith.constant 0 : i32
    %c0_i32_1 = arith.constant 0 : i32
    return %c0_i32, %c0_i32_0 : i32, i32
  }
  func.func @transform_4(%arg0: i32) -> (i32, i32) {
    %c0_i32 = arith.constant 0 : i32
    %c0_i32_0 = arith.constant 0 : i32
    %c0_i32_1 = arith.constant 0 : i32
    return %c0_i32, %c0_i32_0 : i32, i32
  }
  func.func @transform_5(%arg0: i32) -> (i32, i32) {
    %c0_i32 = arith.constant 0 : i32
    %c0_i32_0 = arith.constant 0 : i32
    %c0_i32_1 = arith.constant 0 : i32
    return %c0_i32, %c0_i32_0 : i32, i32
  }
  func.func @transform_6(%arg0: i32) -> (i32, i32) {
    %c0_i32 = arith.constant 0 : i32
    %c0_i32_0 = arith.constant 0 : i32
    return %c0_i32, %arg0 : i32, i32
  }
}

</mosaic_0001>

<llo_original>
// kernel: tpu_custom_call.1
$region0: #{tpu_custom_call.1}
  #allocation0 [shape = 'u32[]', space=smem, size = 0x4, offset = 0x4, fixed_abs, tag = 'smem constant byte address 0x4 - core index']
  #allocation1 [shape = 'u32[72,128]{1,0:T(1,128)}', space=vmem, size = 0x9000, scoped, tag = 'internal scratch']
  %s0 = inlined_call_operand.vmem [shape: bf16[9,128], index: 0, kind: input, shape index: {}]
  %s1 = inlined_call_operand.vmem [shape: bf16[50,9], index: 1, kind: input, shape index: {}]
  %s2 = inlined_call_operand.vmem [shape: bf16[100,50], index: 2, kind: input, shape index: {}]
  %s3 = inlined_call_operand.vmem [shape: bf16[100,1], index: 3, kind: input, shape index: {}]
  %s4 = inlined_call_operand.vmem [shape: bf16[13,100], index: 4, kind: input, shape index: {}]
  %s5 = inlined_call_operand.vmem [shape: bf16[13,1], index: 5, kind: input, shape index: {}]
  %s6 = inlined_call_operand.hbm [shape: f32[13,128], index: 6, kind: output, shape index: {}]
  %s7 = sld [smem:[#allocation0]]
  $region34: #{tpu_custom_call.1} parent=0
    _
  %s9 = ssub.s32 1, %s7
  %s10 = scalar_select 0, %s9, %s7
  $region1: #{tpu_custom_call.1} parent=0
    #allocation2 [shape = 'u8[8192]{0}', space=vmem, size = 0x2000, scoped, tag = 'output window, operand 0, single buffered']
    #allocation3 [shape = 's32[1]{0}', space=sflag, size = 0x4, scoped, tag = 'scoped memory for tpu_custom_call.1']
    %11 = vsyncpa [#allocation3], 0
    // Predicated region
    $region2: #{tpu_custom_call.1} parent=1 // pred_check
      _
    $region3: #{tpu_custom_call.1} parent=1 // pred_check_branch
      %13 = sbr.rel (0) target = $region5
    $region4: #{tpu_custom_call.1} parent=1 // pred_region
      _
    $region5: #{tpu_custom_call.1} parent=1 // pred_fallthru
      _
    // Predicated region
    $region6: #{tpu_custom_call.1} parent=1 // pred_check
      _
    $region7: #{tpu_custom_call.1} parent=1 // pred_check_branch
      %15 = sbr.rel (0) target = $region9
    $region8: #{tpu_custom_call.1} parent=1 // pred_region
      _
    $region9: #{tpu_custom_call.1} parent=1 // pred_fallthru
      _
    // Predicated region
    $region10: #{tpu_custom_call.1} parent=1 // pred_check
      _
    $region11: #{tpu_custom_call.1} parent=1 // pred_check_branch
      %17 = sbr.rel (0) target = $region13
    $region12: #{tpu_custom_call.1} parent=1 // pred_region
      _
    $region13: #{tpu_custom_call.1} parent=1 // pred_fallthru
      _
    // Predicated region
    $region14: #{tpu_custom_call.1} parent=1 // pred_check
      _
    $region15: #{tpu_custom_call.1} parent=1 // pred_check_branch
      %19 = sbr.rel (0) target = $region17
    $region16: #{tpu_custom_call.1} parent=1 // pred_region
      _
    $region17: #{tpu_custom_call.1} parent=1 // pred_fallthru
      _
    // Predicated region
    $region18: #{tpu_custom_call.1} parent=1 // pred_check
      _
    $region19: #{tpu_custom_call.1} parent=1 // pred_check_branch
      %21 = sbr.rel (0) target = $region21
    $region20: #{tpu_custom_call.1} parent=1 // pred_region
      _
    $region21: #{tpu_custom_call.1} parent=1 // pred_fallthru
      _
    // Predicated region
    $region22: #{tpu_custom_call.1} parent=1 // pred_check
      _
    $region23: #{tpu_custom_call.1} parent=1 // pred_check_branch
      %23 = sbr.rel (0) target = $region25
    $region24: #{tpu_custom_call.1} parent=1 // pred_region
      _
    $region25: #{tpu_custom_call.1} parent=1 // pred_fallthru
      _
    %v25 = vld [vmem:[%s0] sm:$0xf]
    %v26 = vld [vmem:[%s0 + $0x4] sm:$0x1]
    %v27 = vld [vmem:[%s1] sm:$0xf]
    %v28 = vld [vmem:[%s1 + $0x4] sm:$0xf]
    %v29 = vld [vmem:[%s1 + $0x8] sm:$0xf]
    %v30 = vld [vmem:[%s1 + $0xc] sm:$0xf]
    %v31 = vld [vmem:[%s1 + $0x10] sm:$0xf]
    %v32 = vld [vmem:[%s1 + $0x14] sm:$0xf]
    %v33 = vld [vmem:[%s1 + $0x18] sm:$0x1]
    %v41 = vunpack.c.l.b16 %v27
    %v42 = vunpack.c.l.b16 %v28
    %v43 = vunpack.c.l.b16 %v29
    %v44 = vunpack.c.l.b16 %v30
    %v45 = vunpack.c.l.b16 %v31
    %v46 = vunpack.c.l.b16 %v32
    %v47 = vunpack.c.l.b16 %v33
    %v48 = vpack.c.b16 %v42, %v41
    %v49 = vpack.c.b16 %v44, %v43
    %v50 = vpack.c.b16 %v46, %v45
    %v51 = vpack.c.b16 %v47, %v47
    %v54 = vunpack.c.l.b16 %v25
    %v55 = vunpack.c.l.b16 %v26
    %v56 = vpack.c.b16 %v55, %v54
    %vm57 = vcmask 72704
    %v59 = vsel %vm57, %v48, 0
    %v62 = vsel %vm57, %v49, 0
    %v65 = vsel %vm57, %v50, 0
    %v68 = vsel %vm57, %v51, 0
    %vm70 = vcmask 1043456
    %vm71 = vcmask 1044480
    %v72 = vsel %vm70, 4294967295, 65535
    %v73 = vsel %vm71, %v72, 0
    %v75 = vand.u32 %v56, %v73
    %77 = vmatpush.bf16.msra.mxu0 0
    %78 = vmatpush.bf16.msra.mxu0 0
    %79 = vmatpush.bf16.msra.mxu0 0
    %80 = vmatpush.bf16.msra.mxu0 0
    %81 = vmatpush.bf16.msra.mxu0 0
    %82 = vmatpush.bf16.msra.mxu0 0
    %83 = vmatpush.bf16.msra.mxu0 0
    %84 = vmatpush.bf16.msra.mxu0 %v75
    %85 = vmatmul.bf16.gmra.mxu0 %v59
    %v86 = vpop.f32.mrf.mxu0
    %v87 = vadd.f32 0.0, %v86
    %v88 = vpop.f32.mrf.mxu0
    %v89 = vadd.f32 0.0, %v88
    %90 = vmatmul.bf16.gmra.mxu0 %v62
    %v91 = vpop.f32.mrf.mxu0
    %v92 = vadd.f32 0.0, %v91
    %v93 = vpop.f32.mrf.mxu0
    %v94 = vadd.f32 0.0, %v93
    %95 = vmatmul.bf16.gmra.mxu0 %v65
    %v96 = vpop.f32.mrf.mxu0
    %v97 = vadd.f32 0.0, %v96
    %v98 = vpop.f32.mrf.mxu0
    %v99 = vadd.f32 0.0, %v98
    %100 = vmatmul.bf16.gmra.mxu0 %v68
    %v101 = vpop.f32.mrf.mxu0
    %v102 = vadd.f32 0.0, %v101
    %v103 = vpop.f32.mrf.mxu0
    %104 = vdwg.mxu0
    %v105 = vpack.c.bf16 %v87, %v87
    %v106 = vpack.c.bf16 %v89, %v89
    %v107 = vpack.c.bf16 %v92, %v92
    %v108 = vpack.c.bf16 %v94, %v94
    %v109 = vpack.c.bf16 %v97, %v97
    %v110 = vpack.c.bf16 %v99, %v99
    %v111 = vpack.c.bf16 %v102, %v102
    %v112 = vunpack.c.l.bf16 %v105
    %v113 = vunpack.c.l.bf16 %v106
    %v114 = vunpack.c.l.bf16 %v107
    %v115 = vunpack.c.l.bf16 %v108
    %v116 = vunpack.c.l.bf16 %v109
    %v117 = vunpack.c.l.bf16 %v110
    %v118 = vunpack.c.l.bf16 %v111
    %v119 = vmax.f32 %v112, 0.0
    %v120 = vmax.f32 %v113, 0.0
    %v121 = vmax.f32 %v114, 0.0
    %v122 = vmax.f32 %v115, 0.0
    %v123 = vmax.f32 %v116, 0.0
    %v124 = vmax.f32 %v117, 0.0
    %v125 = vmax.f32 %v118, 0.0
    %v126 = vpack.c.bf16 %v120, %v119
    %v127 = vpack.c.bf16 %v122, %v121
    %v128 = vpack.c.bf16 %v124, %v123
    %v129 = vpack.c.bf16 %v125, %v125
    %v130 = vld [vmem:[%s2] sm:$0xf]
    %v131 = vld [vmem:[%s2 + $0x4] sm:$0xf]
    %v132 = vld [vmem:[%s2 + $0x8] sm:$0xf]
    %v133 = vld [vmem:[%s2 + $0xc] sm:$0xf]
    %v134 = vld [vmem:[%s2 + $0x10] sm:$0xf]
    %v135 = vld [vmem:[%s2 + $0x14] sm:$0xf]
    %v136 = vld [vmem:[%s2 + $0x18] sm:$0xf]
    %v137 = vld [vmem:[%s2 + $0x1c] sm:$0xf]
    %v138 = vld [vmem:[%s2 + $0x20] sm:$0xf]
    %v139 = vld [vmem:[%s2 + $0x24] sm:$0xf]
    %v140 = vld [vmem:[%s2 + $0x28] sm:$0xf]
    %v141 = vld [vmem:[%s2 + $0x2c] sm:$0xf]
    %v142 = vld [vmem:[%s2 + $0x30] sm:$0x3]
    %v156 = vunpack.c.l.b16 %v130
    %v157 = vunpack.c.l.b16 %v131
    %v158 = vunpack.c.l.b16 %v132
    %v159 = vunpack.c.l.b16 %v133
    %v160 = vunpack.c.l.b16 %v134
    %v161 = vunpack.c.l.b16 %v135
    %v162 = vunpack.c.l.b16 %v136
    %v163 = vunpack.c.l.b16 %v137
    %v164 = vunpack.c.l.b16 %v138
    %v165 = vunpack.c.l.b16 %v139
    %v166 = vunpack.c.l.b16 %v140
    %v167 = vunpack.c.l.b16 %v141
    %v168 = vunpack.c.l.b16 %v142
    %v169 = vpack.c.b16 %v157, %v156
    %v170 = vpack.c.b16 %v159, %v158
    %v171 = vpack.c.b16 %v161, %v160
    %v172 = vpack.c.b16 %v163, %v162
    %v173 = vpack.c.b16 %v165, %v164
    %v174 = vpack.c.b16 %v167, %v166
    %v175 = vpack.c.b16 %v168, %v168
    %vm176 = vcmask 408576
    %v178 = vsel %vm176, %v169, 0
    %v181 = vsel %vm176, %v170, 0
    %v184 = vsel %vm176, %v171, 0
    %v187 = vsel %vm176, %v172, 0
    %v190 = vsel %vm176, %v173, 0
    %v193 = vsel %vm176, %v174, 0
    %v196 = vsel %vm176, %v175, 0
    %vm198 = vcmask 1040384
    %v200 = vsel %vm198, %v129, 0
    %202 = vmatpush.bf16.msra.mxu0 0
    %203 = vmatpush.bf16.msra.mxu0 0
    %204 = vmatpush.bf16.msra.mxu0 0
    %205 = vmatpush.bf16.msra.mxu0 0
    %206 = vmatpush.bf16.msra.mxu0 %v200
    %207 = vmatpush.bf16.msra.mxu0 %v128
    %208 = vmatpush.bf16.msra.mxu0 %v127
    %209 = vmatpush.bf16.msra.mxu0 %v126
    %210 = vmatmul.bf16.gmra.mxu0 %v178
    %v211 = vpop.f32.mrf.mxu0
    %v212 = vadd.f32 0.0, %v211
    %v213 = vpop.f32.mrf.mxu0
    %v214 = vadd.f32 0.0, %v213
    %215 = vmatmul.bf16.gmra.mxu0 %v181
    %v216 = vpop.f32.mrf.mxu0
    %v217 = vadd.f32 0.0, %v216
    %v218 = vpop.f32.mrf.mxu0
    %v219 = vadd.f32 0.0, %v218
    %220 = vmatmul.bf16.gmra.mxu0 %v184
    %v221 = vpop.f32.mrf.mxu0
    %v222 = vadd.f32 0.0, %v221
    %v223 = vpop.f32.mrf.mxu0
    %v224 = vadd.f32 0.0, %v223
    %225 = vmatmul.bf16.gmra.mxu0 %v187
    %v226 = vpop.f32.mrf.mxu0
    %v227 = vadd.f32 0.0, %v226
    %v228 = vpop.f32.mrf.mxu0
    %v229 = vadd.f32 0.0, %v228
    %230 = vmatmul.bf16.gmra.mxu0 %v190
    %v231 = vpop.f32.mrf.mxu0
    %v232 = vadd.f32 0.0, %v231
    %v233 = vpop.f32.mrf.mxu0
    %v234 = vadd.f32 0.0, %v233
    %235 = vmatmul.bf16.gmra.mxu0 %v193
    %v236 = vpop.f32.mrf.mxu0
    %v237 = vadd.f32 0.0, %v236
    %v238 = vpop.f32.mrf.mxu0
    %v239 = vadd.f32 0.0, %v238
    %240 = vmatmul.bf16.gmra.mxu0 %v196
    %v241 = vpop.f32.mrf.mxu0
    %v242 = vadd.f32 0.0, %v241
    %v243 = vpop.f32.mrf.mxu0
    %244 = vdwg.mxu0
    %v245 = vpack.c.bf16 %v212, %v212
    %v246 = vpack.c.bf16 %v214, %v214
    %v247 = vpack.c.bf16 %v217, %v217
    %v248 = vpack.c.bf16 %v219, %v219
    %v249 = vpack.c.bf16 %v222, %v222
    %v250 = vpack.c.bf16 %v224, %v224
    %v251 = vpack.c.bf16 %v227, %v227
    %v252 = vpack.c.bf16 %v229, %v229
    %v253 = vpack.c.bf16 %v232, %v232
    %v254 = vpack.c.bf16 %v234, %v234
    %v255 = vpack.c.bf16 %v237, %v237
    %v256 = vpack.c.bf16 %v239, %v239
    %v257 = vpack.c.bf16 %v242, %v242
    %v258 = vld [vmem:[%s3] sm:$0xf]
    %v259 = vld [vmem:[%s3 + $0x4] sm:$0xf]
    %v260 = vld [vmem:[%s3 + $0x8] sm:$0xf]
    %v261 = vld [vmem:[%s3 + $0xc] sm:$0xf]
    %v262 = vld [vmem:[%s3 + $0x10] sm:$0xf]
    %v263 = vld [vmem:[%s3 + $0x14] sm:$0xf]
    %v264 = vld [vmem:[%s3 + $0x18] sm:$0xf]
    %v265 = vld [vmem:[%s3 + $0x1c] sm:$0xf]
    %v266 = vld [vmem:[%s3 + $0x20] sm:$0xf]
    %v267 = vld [vmem:[%s3 + $0x24] sm:$0xf]
    %v268 = vld [vmem:[%s3 + $0x28] sm:$0xf]
    %v269 = vld [vmem:[%s3 + $0x2c] sm:$0xf]
    %v270 = vld [vmem:[%s3 + $0x30] sm:$0x3]
    %272 = vset.pattern.permute.xlu0 0
    %273 = vperm.xlu0 %272, %v258
    %v274 = vpop.permute.xlu0 %273
    %v277 = vunpack.c.l.s4 839922192
    %v278 = vunpack.c.0.s8 %v277
    %v279 = vperm.slane %v274, %v278
    %281 = vset.pattern.permute.xlu0 0
    %282 = vperm.xlu0 %281, %v259
    %v283 = vpop.permute.xlu0 %282
    %v286 = vunpack.c.l.s4 839922192
    %v287 = vunpack.c.0.s8 %v286
    %v288 = vperm.slane %v283, %v287
    %290 = vset.pattern.permute.xlu0 0
    %291 = vperm.xlu0 %290, %v260
    %v292 = vpop.permute.xlu0 %291
    %v295 = vunpack.c.l.s4 839922192
    %v296 = vunpack.c.0.s8 %v295
    %v297 = vperm.slane %v292, %v296
    %299 = vset.pattern.permute.xlu0 0
    %300 = vperm.xlu0 %299, %v261
    %v301 = vpop.permute.xlu0 %300
    %v304 = vunpack.c.l.s4 839922192
    %v305 = vunpack.c.0.s8 %v304
    %v306 = vperm.slane %v301, %v305
    %308 = vset.pattern.permute.xlu0 0
    %309 = vperm.xlu0 %308, %v262
    %v310 = vpop.permute.xlu0 %309
    %v313 = vunpack.c.l.s4 839922192
    %v314 = vunpack.c.0.s8 %v313
    %v315 = vperm.slane %v310, %v314
    %317 = vset.pattern.permute.xlu0 0
    %318 = vperm.xlu0 %317, %v263
    %v319 = vpop.permute.xlu0 %318
    %v322 = vunpack.c.l.s4 839922192
    %v323 = vunpack.c.0.s8 %v322
    %v324 = vperm.slane %v319, %v323
    %326 = vset.pattern.permute.xlu0 0
    %327 = vperm.xlu0 %326, %v264
    %v328 = vpop.permute.xlu0 %327
    %v331 = vunpack.c.l.s4 839922192
    %v332 = vunpack.c.0.s8 %v331
    %v333 = vperm.slane %v328, %v332
    %335 = vset.pattern.permute.xlu0 0
    %336 = vperm.xlu0 %335, %v265
    %v337 = vpop.permute.xlu0 %336
    %v340 = vunpack.c.l.s4 839922192
    %v341 = vunpack.c.0.s8 %v340
    %v342 = vperm.slane %v337, %v341
    %344 = vset.pattern.permute.xlu0 0
    %345 = vperm.xlu0 %344, %v266
    %v346 = vpop.permute.xlu0 %345
    %v349 = vunpack.c.l.s4 839922192
    %v350 = vunpack.c.0.s8 %v349
    %v351 = vperm.slane %v346, %v350
    %353 = vset.pattern.permute.xlu0 0
    %354 = vperm.xlu0 %353, %v267
    %v355 = vpop.permute.xlu0 %354
    %v358 = vunpack.c.l.s4 839922192
    %v359 = vunpack.c.0.s8 %v358
    %v360 = vperm.slane %v355, %v359
    %362 = vset.pattern.permute.xlu0 0
    %363 = vperm.xlu0 %362, %v268
    %v364 = vpop.permute.xlu0 %363
    %v367 = vunpack.c.l.s4 839922192
    %v368 = vunpack.c.0.s8 %v367
    %v369 = vperm.slane %v364, %v368
    %371 = vset.pattern.permute.xlu0 0
    %372 = vperm.xlu0 %371, %v269
    %v373 = vpop.permute.xlu0 %372
    %v376 = vunpack.c.l.s4 839922192
    %v377 = vunpack.c.0.s8 %v376
    %v378 = vperm.slane %v373, %v377
    %380 = vset.pattern.permute.xlu0 0
    %381 = vperm.xlu0 %380, %v270
    %v382 = vpop.permute.xlu0 %381
    %v385 = vunpack.c.l.s4 839922192
    %v386 = vunpack.c.0.s8 %v385
    %v387 = vperm.slane %v382, %v386
    %v388 = vunpack.c.l.bf16 %v245
    %v389 = vunpack.c.l.bf16 %v246
    %v390 = vunpack.c.l.bf16 %v247
    %v391 = vunpack.c.l.bf16 %v248
    %v392 = vunpack.c.l.bf16 %v249
    %v393 = vunpack.c.l.bf16 %v250
    %v394 = vunpack.c.l.bf16 %v251
    %v395 = vunpack.c.l.bf16 %v252
    %v396 = vunpack.c.l.bf16 %v253
    %v397 = vunpack.c.l.bf16 %v254
    %v398 = vunpack.c.l.bf16 %v255
    %v399 = vunpack.c.l.bf16 %v256
    %v400 = vunpack.c.l.bf16 %v257
    %v401 = vunpack.c.l.bf16 %v279
    %v402 = vunpack.c.l.bf16 %v288
    %v403 = vunpack.c.l.bf16 %v297
    %v404 = vunpack.c.l.bf16 %v306
    %v405 = vunpack.c.l.bf16 %v315
    %v406 = vunpack.c.l.bf16 %v324
    %v407 = vunpack.c.l.bf16 %v333
    %v408 = vunpack.c.l.bf16 %v342
    %v409 = vunpack.c.l.bf16 %v351
    %v410 = vunpack.c.l.bf16 %v360
    %v411 = vunpack.c.l.bf16 %v369
    %v412 = vunpack.c.l.bf16 %v378
    %v413 = vunpack.c.l.bf16 %v387
    %v414 = vadd.f32 %v388, %v401
    %v415 = vadd.f32 %v389, %v402
    %v416 = vadd.f32 %v390, %v403
    %v417 = vadd.f32 %v391, %v404
    %v418 = vadd.f32 %v392, %v405
    %v419 = vadd.f32 %v393, %v406
    %v420 = vadd.f32 %v394, %v407
    %v421 = vadd.f32 %v395, %v408
    %v422 = vadd.f32 %v396, %v409
    %v423 = vadd.f32 %v397, %v410
    %v424 = vadd.f32 %v398, %v411
    %v425 = vadd.f32 %v399, %v412
    %v426 = vadd.f32 %v400, %v413
    %v427 = vpack.c.bf16 %v414, %v414
    %v428 = vpack.c.bf16 %v415, %v415
    %v429 = vpack.c.bf16 %v416, %v416
    %v430 = vpack.c.bf16 %v417, %v417
    %v431 = vpack.c.bf16 %v418, %v418
    %v432 = vpack.c.bf16 %v419, %v419
    %v433 = vpack.c.bf16 %v420, %v420
    %v434 = vpack.c.bf16 %v421, %v421
    %v435 = vpack.c.bf16 %v422, %v422
    %v436 = vpack.c.bf16 %v423, %v423
    %v437 = vpack.c.bf16 %v424, %v424
    %v438 = vpack.c.bf16 %v425, %v425
    %v439 = vpack.c.bf16 %v426, %v426
    %v440 = vunpack.c.l.bf16 %v427
    %v441 = vunpack.c.l.bf16 %v428
    %v442 = vunpack.c.l.bf16 %v429
    %v443 = vunpack.c.l.bf16 %v430
    %v444 = vunpack.c.l.bf16 %v431
    %v445 = vunpack.c.l.bf16 %v432
    %v446 = vunpack.c.l.bf16 %v433
    %v447 = vunpack.c.l.bf16 %v434
    %v448 = vunpack.c.l.bf16 %v435
    %v449 = vunpack.c.l.bf16 %v436
    %v450 = vunpack.c.l.bf16 %v437
    %v451 = vunpack.c.l.bf16 %v438
    %v452 = vunpack.c.l.bf16 %v439
    %v453 = vmax.f32 %v440, 0.0
    %v454 = vmax.f32 %v441, 0.0
    %v455 = vmax.f32 %v442, 0.0
    %v456 = vmax.f32 %v443, 0.0
    %v457 = vmax.f32 %v444, 0.0
    %v458 = vmax.f32 %v445, 0.0
    %v459 = vmax.f32 %v446, 0.0
    %v460 = vmax.f32 %v447, 0.0
    %v461 = vmax.f32 %v448, 0.0
    %v462 = vmax.f32 %v449, 0.0
    %v463 = vmax.f32 %v450, 0.0
    %v464 = vmax.f32 %v451, 0.0
    %v465 = vmax.f32 %v452, 0.0
    %v466 = vpack.c.bf16 %v454, %v453
    %v467 = vpack.c.bf16 %v456, %v455
    %v468 = vpack.c.bf16 %v458, %v457
    %v469 = vpack.c.bf16 %v460, %v459
    %v470 = vpack.c.bf16 %v462, %v461
    %v471 = vpack.c.bf16 %v464, %v463
    %v472 = vpack.c.bf16 %v465, %v465
    %v473 = vld [vmem:[%s4] sm:$0xf]
    %v474 = vld [vmem:[%s4 + $0x4] sm:$0x7]
    %v477 = vunpack.c.l.b16 %v473
    %v478 = vunpack.c.l.b16 %v474
    %v479 = vpack.c.b16 %v478, %v477
    %vm480 = vcmask 818176
    %v482 = vsel %vm480, %v479, 0
    %vm484 = vcmask 1041408
    %v486 = vsel %vm484, %v472, 0
    %488 = vmatpush.bf16.msra.mxu0 0
    %489 = vmatpush.bf16.msra.mxu0 %v486
    %490 = vmatpush.bf16.msra.mxu0 %v471
    %491 = vmatpush.bf16.msra.mxu0 %v470
    %492 = vmatpush.bf16.msra.mxu0 %v469
    %493 = vmatpush.bf16.msra.mxu0 %v468
    %494 = vmatpush.bf16.msra.mxu0 %v467
    %495 = vmatpush.bf16.msra.mxu0 %v466
    %496 = vmatmul.bf16.gmra.mxu0 %v482
    %v497 = vpop.f32.mrf.mxu0
    %v498 = vadd.f32 0.0, %v497
    %v499 = vpop.f32.mrf.mxu0
    %v500 = vadd.f32 0.0, %v499
    %501 = vdwg.mxu0
    %v502 = vpack.c.bf16 %v498, %v498
    %v503 = vpack.c.bf16 %v500, %v500
    %v504 = vld [vmem:[%s5] sm:$0xf]
    %v505 = vld [vmem:[%s5 + $0x4] sm:$0x7]
    %507 = vset.pattern.permute.xlu0 0
    %508 = vperm.xlu0 %507, %v504
    %v509 = vpop.permute.xlu0 %508
    %v512 = vunpack.c.l.s4 839922192
    %v513 = vunpack.c.0.s8 %v512
    %v514 = vperm.slane %v509, %v513
    %516 = vset.pattern.permute.xlu0 0
    %517 = vperm.xlu0 %516, %v505
    %v518 = vpop.permute.xlu0 %517
    %v521 = vunpack.c.l.s4 839922192
    %v522 = vunpack.c.0.s8 %v521
    %v523 = vperm.slane %v518, %v522
    %v524 = vunpack.c.l.bf16 %v502
    %v525 = vunpack.c.l.bf16 %v503
    %v526 = vunpack.c.l.bf16 %v514
    %v527 = vunpack.c.l.bf16 %v523
    %v528 = vadd.f32 %v524, %v526
    %v529 = vadd.f32 %v525, %v527
    %v530 = vpack.c.bf16 %v528, %v528
    %v531 = vpack.c.bf16 %v529, %v529
    %v532 = vunpack.c.l.bf16 %v530
    %v533 = vunpack.c.l.bf16 %v531
    %534 = vst [vmem:[#allocation2] sm:$0xff] %v532
    %535 = vst [vmem:[#allocation2 + $0x8] sm:$0x1f] %v533
    // Predicated region
    $region26: #{tpu_custom_call.1} parent=1 // pred_check
      _
    $region27: #{tpu_custom_call.1} parent=1 // pred_check_branch
      %537 = sbr.rel (0) target = $region29
    $region28: #{tpu_custom_call.1} parent=1 // pred_region
      %539 = vsyncadd [#allocation3], 0
      %s540 = sshll.u32 [#allocation2], 4
      %s541 = int_to_ptr.vmem [resolvable:$true] %s540
      %s542 = sshll.u32 %s6, 4
      %s543 = int_to_ptr.hbm [resolvable:$true] %s542
      %548 = dma.vmem_to_hbm [thread:$0]  %s541, 256, %s543, [#allocation3], 128, 128, 8
    $region29: #{tpu_custom_call.1} parent=1 // pred_fallthru
      _
    // Predicated region
    $region30: #{tpu_custom_call.1} parent=1 // pred_check
      _
    $region31: #{tpu_custom_call.1} parent=1 // pred_check_branch
      %550 = sbr.rel (0) target = $region33
    $region32: #{tpu_custom_call.1} parent=1 // pred_region
      %552 = dma.done [#allocation3], 256
    $region33: #{tpu_custom_call.1} parent=1 // pred_fallthru
      _
    %553 = vsyncpa [#allocation3], 1

</llo_original>
